<compile_context>
chip_gen: v5e
topology: v5e:2x2
jax: 0.10.0
libtpu: 0.0.40
codegen_flags: <defaults>
</compile_context>

<pallas_src>
import functools

import jax
import jax.numpy as jnp
from jax.experimental import pallas as pl
from jax.experimental.pallas import tpu as pltpu

NEG_INF = -1e9
LN_EPS = 1e-5


# ------------------------------ small helpers -------------------------------
_ERF_P = 0.3275911
_ERF_A = (0.254829592, -0.284496736, 1.421413741, -1.453152027, 1.061405429)


def _erf(x):
    # Abramowitz & Stegun 7.1.26 (max abs err ~1.5e-7 == f32 precision).
    s = jnp.sign(x)
    a = jnp.abs(x)
    t = 1.0 / (1.0 + _ERF_P * a)
    poly = t * (_ERF_A[0] + t * (_ERF_A[1] + t * (_ERF_A[2] + t * (_ERF_A[3] + t * _ERF_A[4]))))
    return s * (1.0 - poly * jnp.exp(-a * a))


def _gelu_exact(x):
    # erf-based ("exact") GELU, matching BART's activation_function="gelu".  f32 math.
    return 0.5 * x * (1.0 + _erf(x * 0.7071067811865476))


def _tile(dim, pref, align):
    """Largest tile <= pref that divides dim and is a multiple of `align`;
    falls back to the full dim (always legal: block == full array dim)."""
    if dim <= pref:
        return dim
    t = (min(pref, dim) // align) * align
    while t >= align:
        if dim % t == 0:
            return t
        t -= align
    return dim


# --------------------------- tiled linear (matmul) ---------------------------
def _linear_kernel(x_ref, w_ref, b_ref, o_ref, acc_ref, *, activation, nk):
    @pl.when(pl.program_id(2) == 0)
    def _():
        acc_ref[...] = jnp.zeros_like(acc_ref)

    acc_ref[...] += jnp.dot(
        x_ref[...].astype(jnp.bfloat16), w_ref[...],
        preferred_element_type=jnp.float32)

    @pl.when(pl.program_id(2) == nk - 1)
    def _():
        y = acc_ref[...] + b_ref[...]
        if activation == "gelu":
            y = _gelu_exact(y)
        o_ref[...] = y.astype(o_ref.dtype)


def linear(x, w, b, activation="none", tm=256, tn=512, tk=512):
    """y = act(x @ w + b).  x f32 (M,K), w bf16 (K,N) [torch Linear weight^T], b f32 (N,)."""
    M, K = x.shape
    _, N = w.shape
    tm = _tile(M, tm, 8)
    tn = _tile(N, tn, 128)
    tk = _tile(K, tk, 128)
    nk = K // tk
    return pl.pallas_call(
        functools.partial(_linear_kernel, activation=activation, nk=nk),
        out_shape=jax.ShapeDtypeStruct((M, N), jnp.float32),
        grid=(M // tm, N // tn, nk),
        in_specs=[
            pl.BlockSpec((tm, tk), lambda i, j, k: (i, k)),
            pl.BlockSpec((tk, tn), lambda i, j, k: (k, j)),
            pl.BlockSpec((1, tn), lambda i, j, k: (0, j)),
        ],
        out_specs=pl.BlockSpec((tm, tn), lambda i, j, k: (i, j)),
        scratch_shapes=[pltpu.VMEM((tm, tn), jnp.float32)],
        compiler_params=pltpu.CompilerParams(
            dimension_semantics=("parallel", "parallel", "arbitrary")),
    )(x, w, b.reshape(1, N))


# --------------- fused matmul + bias + residual + LayerNorm ------------------
def _matmul_add_ln_kernel(x_ref, w_ref, b_ref, r_ref, g_ref, be_ref, o_ref, acc_ref,
                          *, eps, nk):
    @pl.when(pl.program_id(1) == 0)
    def _():
        acc_ref[...] = jnp.zeros_like(acc_ref)

    acc_ref[...] += jnp.dot(
        x_ref[...].astype(jnp.bfloat16), w_ref[...],
        preferred_element_type=jnp.float32)

    @pl.when(pl.program_id(1) == nk - 1)
    def _():
        y = acc_ref[...] + b_ref[...] + r_ref[...].astype(jnp.float32)
        mu = jnp.mean(y, axis=-1, keepdims=True)
        var = jnp.mean(jnp.square(y - mu), axis=-1, keepdims=True)
        yn = (y - mu) * jax.lax.rsqrt(var + eps)
        o_ref[...] = (yn * g_ref[...] + be_ref[...]).astype(o_ref.dtype)


def matmul_add_ln(x, w, b, residual, gamma, beta, eps=LN_EPS, tm=256, tk=512):
    """LayerNorm(x @ w + b + residual).  N (=D) kept whole (LN needs the full row)."""
    M, K = x.shape
    _, N = w.shape
    tm = _tile(M, tm, 8)
    tk = _tile(K, tk, 128)
    nk = K // tk
    return pl.pallas_call(
        functools.partial(_matmul_add_ln_kernel, eps=eps, nk=nk),
        out_shape=jax.ShapeDtypeStruct((M, N), jnp.float32),
        grid=(M // tm, nk),
        in_specs=[
            pl.BlockSpec((tm, tk), lambda i, k: (i, k)),
            pl.BlockSpec((tk, N), lambda i, k: (k, 0)),
            pl.BlockSpec((1, N), lambda i, k: (0, 0)),
            pl.BlockSpec((tm, N), lambda i, k: (i, 0)),
            pl.BlockSpec((1, N), lambda i, k: (0, 0)),
            pl.BlockSpec((1, N), lambda i, k: (0, 0)),
        ],
        out_specs=pl.BlockSpec((tm, N), lambda i, k: (i, 0)),
        scratch_shapes=[pltpu.VMEM((tm, N), jnp.float32)],
        compiler_params=pltpu.CompilerParams(
            dimension_semantics=("parallel", "arbitrary")),
    )(x, w, b.reshape(1, N), residual, gamma.reshape(1, N), beta.reshape(1, N))


# ------------------------------ plain LayerNorm ------------------------------
def _ln_kernel(x_ref, g_ref, b_ref, o_ref, *, eps):
    x = x_ref[...].astype(jnp.float32)
    mu = jnp.mean(x, axis=-1, keepdims=True)
    var = jnp.mean(jnp.square(x - mu), axis=-1, keepdims=True)
    y = (x - mu) * jax.lax.rsqrt(var + eps)
    o_ref[...] = (y * g_ref[...] + b_ref[...]).astype(o_ref.dtype)


def layernorm(x, gamma, beta, eps=LN_EPS, tm=512):
    M, D = x.shape
    tm = _tile(M, tm, 8)
    return pl.pallas_call(
        functools.partial(_ln_kernel, eps=eps),
        out_shape=jax.ShapeDtypeStruct((M, D), jnp.float32),
        grid=(M // tm,),
        in_specs=[
            pl.BlockSpec((tm, D), lambda i: (i, 0)),
            pl.BlockSpec((1, D), lambda i: (0, 0)),
            pl.BlockSpec((1, D), lambda i: (0, 0)),
        ],
        out_specs=pl.BlockSpec((tm, D), lambda i: (i, 0)),
        compiler_params=pltpu.CompilerParams(dimension_semantics=("parallel",)),
    )(x, gamma.reshape(1, D), beta.reshape(1, D))


# ------------------------------ attention kernels ----------------------------
def _mha_core(q_all, k_all, v_all, key_bias, *, causal, n_heads, hd, scale):
    """q_all (Sq, H*hd), k_all/v_all (Sk, H*hd), heads as contiguous column blocks."""
    Sq, Sk = q_all.shape[0], k_all.shape[0]
    causal_bias = None
    if causal:
        row = jax.lax.broadcasted_iota(jnp.int32, (Sq, Sk), 0)
        col = jax.lax.broadcasted_iota(jnp.int32, (Sq, Sk), 1)
        causal_bias = jnp.where(row >= col, 0.0, NEG_INF)
    outs = []
    for h in range(n_heads):
        lo, hi = h * hd, (h + 1) * hd
        q = q_all[:, lo:hi].astype(jnp.bfloat16)
        k = k_all[:, lo:hi].astype(jnp.bfloat16)
        v = v_all[:, lo:hi].astype(jnp.bfloat16)
        # contract on head_dim without an explicit transpose of k
        s = jax.lax.dot_general(q, k, (((1,), (1,)), ((), ())),
                                preferred_element_type=jnp.float32) * scale
        if key_bias is not None:
            s = s + key_bias
        if causal_bias is not None:
            s = s + causal_bias
        m = jnp.max(s, axis=-1, keepdims=True)
        p = jnp.exp(s - m)
        denom = jnp.sum(p, axis=-1, keepdims=True)
        o = jax.lax.dot_general(p.astype(jnp.bfloat16), v, (((1,), (0,)), ((), ())),
                                preferred_element_type=jnp.float32)
        outs.append(o * pl.reciprocal(denom, approx=True))
    out = outs[0] if n_heads == 1 else jnp.concatenate(outs, axis=-1)
    return out


def _self_attn_kernel(*refs, n_heads, hd, scale, causal, has_bias):
    if has_bias:
        qkv_ref, bias_ref, o_ref = refs
    else:
        qkv_ref, o_ref = refs
    D = n_heads * hd
    qkv = qkv_ref[0]                       # (S, 3D)
    q_all = qkv[:, 0:D]
    k_all = qkv[:, D:2 * D]
    v_all = qkv[:, 2 * D:3 * D]
    key_bias = None
    if has_bias:
        key_bias = bias_ref[pl.ds(pl.program_id(0), 1), :]   # (1, Sk) additive bias
    out = _mha_core(q_all, k_all, v_all, key_bias,
                    causal=causal, n_heads=n_heads, hd=hd, scale=scale)
    o_ref[0] = out.astype(o_ref.dtype)


def _cross_attn_kernel(q_ref, kv_ref, o_ref, *, n_heads, hd, scale):
    D = n_heads * hd
    q_all = q_ref[0]                       # (Sq, D)
    kv = kv_ref[0]                         # (Sk, 2D)
    out = _mha_core(q_all, kv[:, 0:D], kv[:, D:2 * D], None,
                    causal=False, n_heads=n_heads, hd=hd, scale=scale)
    o_ref[0] = out.astype(o_ref.dtype)


def self_attention(qkv, key_bias, n_heads, causal):
    """qkv: (B, S, 3D) packed projections. key_bias: None or (B, S) additive f32 bias."""
    B, S, threeD = qkv.shape
    D = threeD // 3
    hd = D // n_heads
    scale = float(hd) ** -0.5
    has_bias = key_bias is not None
    in_specs = [pl.BlockSpec((1, S, threeD), lambda b: (b, 0, 0))]
    args = [qkv]
    if has_bias:
        in_specs.append(pl.BlockSpec(key_bias.shape, lambda b: (0, 0)))
        args.append(key_bias)
    return pl.pallas_call(
        functools.partial(_self_attn_kernel, n_heads=n_heads, hd=hd, scale=scale,
                          causal=causal, has_bias=has_bias),
        out_shape=jax.ShapeDtypeStruct((B, S, D), jnp.float32),
        grid=(B,),
        in_specs=in_specs,
        out_specs=pl.BlockSpec((1, S, D), lambda b: (b, 0, 0)),
        compiler_params=pltpu.CompilerParams(dimension_semantics=("parallel",)),
    )(*args)


def cross_attention(q, kv, n_heads):
    """q: (B, Sq, D) decoder query proj, kv: (B, Sk, 2D) packed encoder K/V proj."""
    B, Sq, D = q.shape
    Sk = kv.shape[1]
    hd = D // n_heads
    scale = float(hd) ** -0.5
    return pl.pallas_call(
        functools.partial(_cross_attn_kernel, n_heads=n_heads, hd=hd, scale=scale),
        out_shape=jax.ShapeDtypeStruct((B, Sq, D), jnp.float32),
        grid=(B,),
        in_specs=[
            pl.BlockSpec((1, Sq, D), lambda b: (b, 0, 0)),
            pl.BlockSpec((1, Sk, 2 * D), lambda b: (b, 0, 0)),
        ],
        out_specs=pl.BlockSpec((1, Sq, D), lambda b: (b, 0, 0)),
        compiler_params=pltpu.CompilerParams(dimension_semantics=("parallel",)),
    )(q, kv)


# --------------------------- model building blocks --------------------------
def _embed(p, prefix, shared_emb, ids):
    B, S = ids.shape
    D = shared_emb.shape[1]
    tok = jnp.take(shared_emb, ids, axis=0)          # token embedding gather (XLA glue)
    pos = p[prefix + "pos_emb"][2:2 + S]             # BART learned positions: offset 2
    h = (tok + pos[None]).reshape(B * S, D)
    h = layernorm(h, p[prefix + "ln_emb_g"], p[prefix + "ln_emb_b"])
    return h.reshape(B, S, D)


def encode(p, cfg, ids, mask):
    B, S = ids.shape
    D, H = cfg["d_model"], cfg["n_heads"]
    M = B * S
    h = _embed(p, "enc_", p["shared_emb"], ids)
    key_bias = None
    if mask is not None:
        key_bias = (1.0 - mask.astype(jnp.float32)) * NEG_INF     # (B, S), tiny
    for layer in p["enc_layers"]:
        res = h.reshape(M, D)
        sa = layer["self_attn"]
        qkv = linear(res, sa["wqkv"], sa["bqkv"]).reshape(B, S, 3 * D)
        attn = self_attention(qkv, key_bias, H, causal=False).reshape(M, D)
        h2 = matmul_add_ln(attn, sa["wo"], sa["bo"], res, layer["ln1_g"], layer["ln1_b"])
        f = linear(h2, layer["fc1_w"], layer["fc1_b"], activation="gelu")
        h = matmul_add_ln(f, layer["fc2_w"], layer["fc2_b"], h2,
                          layer["ln2_g"], layer["ln2_b"]).reshape(B, S, D)
    return h


def decode(p, cfg, ids, enc_h):
    B, St = ids.shape
    D, H = cfg["d_model"], cfg["n_heads"]
    Ss = enc_h.shape[1]
    M = B * St
    enc_flat = enc_h.reshape(B * Ss, D)
    h = _embed(p, "dec_", p["shared_emb"], ids)
    for layer in p["dec_layers"]:
        res = h.reshape(M, D)
        sa = layer["self_attn"]
        qkv = linear(res, sa["wqkv"], sa["bqkv"]).reshape(B, St, 3 * D)
        attn = self_attention(qkv, None, H, causal=True).reshape(M, D)
        h2 = matmul_add_ln(attn, sa["wo"], sa["bo"], res, layer["ln1_g"], layer["ln1_b"])

        ca = layer["cross_attn"]
        q = linear(h2, ca["wq"], ca["bq"]).reshape(B, St, D)
        kv = linear(enc_flat, ca["wkv"], ca["bkv"]).reshape(B, Ss, 2 * D)
        # reference forward passes no encoder_attention_mask -> cross-attn unmasked
        cattn = cross_attention(q, kv, H).reshape(M, D)
        h3 = matmul_add_ln(cattn, ca["wo"], ca["bo"], h2, layer["ln2_g"], layer["ln2_b"])

        f = linear(h3, layer["fc1_w"], layer["fc1_b"], activation="gelu")
        h = matmul_add_ln(f, layer["fc2_w"], layer["fc2_b"], h3,
                          layer["ln3_g"], layer["ln3_b"]).reshape(B, St, D)
    return h


def bart_translator_forward(params, cfg, encoder_ids, decoder_ids, encoder_mask=None):
    enc_h = encode(params, cfg, encoder_ids, encoder_mask)
    dec_h = decode(params, cfg, decoder_ids, enc_h)
    # NOTE: ProjectionLayer is constructed but never applied in the reference forward.
    return dec_h


# ------------------------------ parameter init ------------------------------
def init_params(key, cfg):
    D, F, V, P = cfg["d_model"], cfg["ffn_dim"], cfg["vocab"], cfg["max_pos"]
    std = 0.02
    keys = iter(jax.random.split(key, 256))

    def dense(n_in, n_out):
        w = (std * jax.random.normal(next(keys), (n_in, n_out), jnp.float32)).astype(jnp.bfloat16)
        return w, jnp.zeros((n_out,), jnp.float32)

    def self_attn():
        wqkv, bqkv = dense(D, 3 * D)          # fused Q/K/V projection
        wo, bo = dense(D, D)
        return dict(wqkv=wqkv, bqkv=bqkv, wo=wo, bo=bo)

    def cross_attn():
        wq, bq = dense(D, D)
        wkv, bkv = dense(D, 2 * D)            # fused K/V projection of encoder states
        wo, bo = dense(D, D)
        return dict(wq=wq, bq=bq, wkv=wkv, bkv=bkv, wo=wo, bo=bo)

    def ln():
        return jnp.ones((D,), jnp.float32), jnp.zeros((D,), jnp.float32)

    shared = std * jax.random.normal(next(keys), (V, D), jnp.float32)
    shared = shared.at[cfg["pad_id"]].set(0.0)       # nn.Embedding padding_idx row

    p = dict(shared_emb=shared)
    for prefix in ("enc_", "dec_"):
        p[prefix + "pos_emb"] = std * jax.random.normal(next(keys), (P + 2, D), jnp.float32)
        g, b = ln()
        p[prefix + "ln_emb_g"], p[prefix + "ln_emb_b"] = g, b

    enc_layers = []
    for _ in range(cfg["enc_layers"]):
        g1, b1 = ln(); g2, b2 = ln()
        w1, bb1 = dense(D, F); w2, bb2 = dense(F, D)
        enc_layers.append(dict(self_attn=self_attn(), ln1_g=g1, ln1_b=b1,
                               fc1_w=w1, fc1_b=bb1, fc2_w=w2, fc2_b=bb2,
                               ln2_g=g2, ln2_b=b2))
    dec_layers = []
    for _ in range(cfg["dec_layers"]):
        g1, b1 = ln(); g2, b2 = ln(); g3, b3 = ln()
        w1, bb1 = dense(D, F); w2, bb2 = dense(F, D)
        dec_layers.append(dict(self_attn=self_attn(), cross_attn=cross_attn(),
                               ln1_g=g1, ln1_b=b1, ln2_g=g2, ln2_b=b2,
                               fc1_w=w1, fc1_b=bb1, fc2_w=w2, fc2_b=bb2,
                               ln3_g=g3, ln3_b=b3))
    p["enc_layers"] = enc_layers
    p["dec_layers"] = dec_layers
    return p


# ----------------------------------- main -----------------------------------
if __name__ == "__main__":
    # Small BART-like config (reference uses d_model=768, 6 layers, vocab=50000).
    cfg = dict(d_model=32, n_heads=4, ffn_dim=64, enc_layers=2, dec_layers=2,
               vocab=100, max_pos=32, pad_id=2)
    key = jax.random.PRNGKey(0)
    kp, ke, kd = jax.random.split(key, 3)
    params = init_params(kp, cfg)

    B, S_src, S_tgt = 2, 8, 8
    encoder_ids = jax.random.randint(ke, (B, S_src), 3, cfg["vocab"], dtype=jnp.int32)
    decoder_ids = jax.random.randint(kd, (B, S_tgt), 3, cfg["vocab"], dtype=jnp.int32)
    encoder_mask = jnp.ones((B, S_src), jnp.int32).at[:, -2:].set(0)  # last 2 src tokens padded

    out = bart_translator_forward(params, cfg, encoder_ids, decoder_ids, encoder_mask)
    out = jax.block_until_ready(out)
    assert out.shape == (B, S_tgt, cfg["d_model"]), out.shape
    assert bool(jnp.all(jnp.isfinite(out)))
    print("KERNEL_OK")
</pallas_src>

<mosaic_0001>
module attributes {stable_mosaic.version = 11 : i64} {
  func.func @_ln_kernel(%arg0: i32, %arg1: memref<16x32xf32, #tpu.memory_space<vmem>>, %arg2: memref<1x32xf32, #tpu.memory_space<vmem>>, %arg3: memref<1x32xf32, #tpu.memory_space<vmem>>, %arg4: memref<16x32xf32, #tpu.memory_space<vmem>>) attributes {dimension_semantics = [#tpu.dimension_semantics<parallel>], iteration_bounds = array<i64: 1>, scalar_prefetch = 0 : i64, scratch_operands = 0 : i64, tpu.core_type = #tpu.core_type<tc>, window_params = [{transform_indices = @transform_0, window_bounds = array<i64: 16, 32>}, {pipeline_mode = #tpu.pipeline_mode<synchronous>, transform_indices = @transform_1, window_bounds = array<i64: 1, 32>}, {pipeline_mode = #tpu.pipeline_mode<synchronous>, transform_indices = @transform_2, window_bounds = array<i64: 1, 32>}, {transform_indices = @transform_3, window_bounds = array<i64: 16, 32>}]} {
    %c0 = arith.constant 0 : index
    %c0_0 = arith.constant 0 : index
    %0 = vector.load %arg1[%c0, %c0_0] : memref<16x32xf32, #tpu.memory_space<vmem>>, vector<16x32xf32>
    %cst = arith.constant dense<0.000000e+00> : vector<16xf32>
    %1 = vector.multi_reduction <add>, %0, %cst [1] : vector<16x32xf32> to vector<16xf32>
    %2 = vector.shape_cast %1 : vector<16xf32> to vector<16x1xf32>
    %cst_1 = arith.constant 3.200000e+01 : f32
    %3 = vector.broadcast %cst_1 : f32 to vector<16x1xf32>
    %4 = arith.divf %2, %3 : vector<16x1xf32>
    %5 = vector.broadcast %4 : vector<16x1xf32> to vector<16x32xf32>
    %6 = arith.subf %0, %5 : vector<16x32xf32>
    %7 = arith.mulf %6, %6 : vector<16x32xf32>
    %cst_2 = arith.constant dense<0.000000e+00> : vector<16xf32>
    %8 = vector.multi_reduction <add>, %7, %cst_2 [1] : vector<16x32xf32> to vector<16xf32>
    %9 = vector.shape_cast %8 : vector<16xf32> to vector<16x1xf32>
    %cst_3 = arith.constant 3.200000e+01 : f32
    %10 = vector.broadcast %cst_3 : f32 to vector<16x1xf32>
    %11 = arith.divf %9, %10 : vector<16x1xf32>
    %12 = vector.broadcast %4 : vector<16x1xf32> to vector<16x32xf32>
    %13 = arith.subf %0, %12 : vector<16x32xf32>
    %cst_4 = arith.constant 9.99999974E-6 : f32
    %14 = vector.broadcast %cst_4 : f32 to vector<16x1xf32>
    %15 = arith.addf %11, %14 : vector<16x1xf32>
    %16 = math.rsqrt %15 : vector<16x1xf32>
    %17 = vector.broadcast %16 : vector<16x1xf32> to vector<16x32xf32>
    %18 = arith.mulf %13, %17 : vector<16x32xf32>
    %c0_5 = arith.constant 0 : index
    %c0_6 = arith.constant 0 : index
    %19 = vector.load %arg2[%c0_5, %c0_6] : memref<1x32xf32, #tpu.memory_space<vmem>>, vector<1x32xf32>
    %20 = vector.broadcast %19 : vector<1x32xf32> to vector<16x32xf32>
    %21 = arith.mulf %18, %20 : vector<16x32xf32>
    %c0_7 = arith.constant 0 : index
    %c0_8 = arith.constant 0 : index
    %22 = vector.load %arg3[%c0_7, %c0_8] : memref<1x32xf32, #tpu.memory_space<vmem>>, vector<1x32xf32>
    %23 = vector.broadcast %22 : vector<1x32xf32> to vector<16x32xf32>
    %24 = arith.addf %21, %23 : vector<16x32xf32>
    %c0_9 = arith.constant 0 : index
    %c0_10 = arith.constant 0 : index
    %25 = vector.load %arg4[%c0_9, %c0_10] : memref<16x32xf32, #tpu.memory_space<vmem>>, vector<16x32xf32>
    tpu.vector_store %arg4[%c0_9, %c0_10], %24 {strides = array<i32>} : memref<16x32xf32, #tpu.memory_space<vmem>>, vector<16x32xf32>,
    return
  }
  func.func @transform_0(%arg0: i32) -> (i32, i32) {
    %c0_i32 = arith.constant 0 : i32
    %c0_i32_0 = arith.constant 0 : i32
    return %arg0, %c0_i32 : i32, i32
  }
  func.func @transform_1(%arg0: i32) -> (i32, i32) {
    %c0_i32 = arith.constant 0 : i32
    %c0_i32_0 = arith.constant 0 : i32
    %c0_i32_1 = arith.constant 0 : i32
    return %c0_i32, %c0_i32_0 : i32, i32
  }
  func.func @transform_2(%arg0: i32) -> (i32, i32) {
    %c0_i32 = arith.constant 0 : i32
    %c0_i32_0 = arith.constant 0 : i32
    %c0_i32_1 = arith.constant 0 : i32
    return %c0_i32, %c0_i32_0 : i32, i32
  }
  func.func @transform_3(%arg0: i32) -> (i32, i32) {
    %c0_i32 = arith.constant 0 : i32
    %c0_i32_0 = arith.constant 0 : i32
    return %arg0, %c0_i32 : i32, i32
  }
}

</mosaic_0001>

<llo_original>
// kernel: tpu_custom_call.1
$region0: #{tpu_custom_call.1}
  #allocation0 [shape = 'u32[]', space=smem, size = 0x4, offset = 0x4, fixed_abs, tag = 'smem constant byte address 0x4 - core index']
  #allocation1 [shape = 'u32[72,128]{1,0:T(1,128)}', space=vmem, size = 0x9000, scoped, tag = 'internal scratch']
  %s0 = inlined_call_operand.hbm [shape: f32[16,32], index: 0, kind: input, shape index: {}]
  %s1 = inlined_call_operand.hbm [shape: f32[1,32], index: 1, kind: input, shape index: {}]
  %s2 = inlined_call_operand.vmem [shape: f32[1,32], index: 2, kind: input, shape index: {}]
  %s3 = inlined_call_operand.hbm [shape: f32[16,32], index: 3, kind: output, shape index: {}]
  %s4 = sld [smem:[#allocation0]]
  $region30: #{tpu_custom_call.1} parent=0
    _
  %s6 = ssub.s32 1, %s4
  %s7 = scalar_select 0, %s6, %s4
  $region1: #{tpu_custom_call.1} parent=0
    #allocation2 [shape = 'u8[8192]{0}', space=vmem, size = 0x2000, scoped, tag = 'input window, operand 0, single buffered']
    #allocation3 [shape = 's32[1]{0}', space=sflag, size = 0x4, scoped, tag = 'scoped memory for tpu_custom_call.1']
    #allocation4 [shape = 's32[1]{0}', space=sflag, size = 0x4, scoped, tag = 'scoped memory for tpu_custom_call.1']
    #allocation5 [shape = 'u8[512]{0}', space=vmem, size = 0x400, scoped, tag = 'input window, operand 1, single buffered']
    #allocation6 [shape = 's32[1]{0}', space=sflag, size = 0x4, scoped, tag = 'scoped memory for tpu_custom_call.1']
    #allocation7 [shape = 'u8[8192]{0}', space=vmem, size = 0x2000, scoped, tag = 'output window, operand 0, single buffered']
    %8 = vsyncpa [#allocation3], 0
    %9 = vsyncpa [#allocation6], 0
    %10 = vsyncpa [#allocation4], 0
    // Predicated region
    $region2: #{tpu_custom_call.1} parent=1 // pred_check
      _
    $region3: #{tpu_custom_call.1} parent=1 // pred_check_branch
      %12 = sbr.rel (0) target = $region5
    $region4: #{tpu_custom_call.1} parent=1 // pred_region
      %14 = vsyncadd [#allocation3], 0
      %s15 = sshll.u32 %s0, 4
      %s16 = int_to_ptr.hbm [resolvable:$true] %s15
      %s17 = sshll.u32 [#allocation2], 4
      %s18 = int_to_ptr.vmem [resolvable:$true] %s17
      %23 = dma.hbm_to_vmem [thread:$0]  %s16, 256, %s18, [#allocation3], 128, 128, 8
    $region5: #{tpu_custom_call.1} parent=1 // pred_fallthru
      _
    // Predicated region
    $region6: #{tpu_custom_call.1} parent=1 // pred_check
      _
    $region7: #{tpu_custom_call.1} parent=1 // pred_check_branch
      %25 = sbr.rel (0) target = $region9
    $region8: #{tpu_custom_call.1} parent=1 // pred_region
      %27 = vsyncadd [#allocation6], 0
      %s29 = sshll.u32 %s1, 4
      %s30 = int_to_ptr.hbm [resolvable:$true] %s29
      %s31 = sshll.u32 [#allocation5], 4
      %s32 = int_to_ptr.vmem [resolvable:$true] %s31
      %34 = dma.hbm_to_vmem [thread:$0]  %s30, 16, %s32, [#allocation6]
    $region9: #{tpu_custom_call.1} parent=1 // pred_fallthru
      _
    // Predicated region
    $region10: #{tpu_custom_call.1} parent=1 // pred_check
      _
    $region11: #{tpu_custom_call.1} parent=1 // pred_check_branch
      %36 = sbr.rel (0) target = $region13
    $region12: #{tpu_custom_call.1} parent=1 // pred_region
      _
    $region13: #{tpu_custom_call.1} parent=1 // pred_fallthru
      _
    // Predicated region
    $region14: #{tpu_custom_call.1} parent=1 // pred_check
      _
    $region15: #{tpu_custom_call.1} parent=1 // pred_check_branch
      %38 = sbr.rel (0) target = $region17
    $region16: #{tpu_custom_call.1} parent=1 // pred_region
      %40 = dma.done [#allocation3], 256
    $region17: #{tpu_custom_call.1} parent=1 // pred_fallthru
      _
    // Predicated region
    $region18: #{tpu_custom_call.1} parent=1 // pred_check
      _
    $region19: #{tpu_custom_call.1} parent=1 // pred_check_branch
      %42 = sbr.rel (0) target = $region21
    $region20: #{tpu_custom_call.1} parent=1 // pred_region
      %44 = dma.done [#allocation6], 16
    $region21: #{tpu_custom_call.1} parent=1 // pred_fallthru
      _
    %v45 = vld [vmem:[#allocation2] sm:$0xff]
    %v46 = vld [vmem:[#allocation2 + $0x8] sm:$0xff]
    %vm47 = vcmask 261120
    %v48 = vsel %vm47, %v45, 0.0
    %49 = vadd.xlane.f32.xlu0 %v48
    %v50 = vpop.xlane.xlu0 %49
    %v51 = vsel %vm47, %v46, 0.0
    %52 = vadd.xlane.f32.xlu0 %v51
    %v53 = vpop.xlane.xlu0 %52
    %v54 = vrcp.pop 32.0
    %v55 = vmul.f32 32.0, %v54
    %v56 = vsub.f32 1.0, %v55
    %v57 = vmul.f32 %v54, %v56
    %v58 = vadd.f32 %v54, %v57
    %vm59 = vweird.f32 %v54
    %v60 = vsel %vm59, %v54, %v58
    %v61 = vmul.f32 %v50, %v60
    %v62 = vmul.f32 %v53, %v60
    %v63 = vsub.f32 %v45, %v61
    %v64 = vsub.f32 %v46, %v62
    %v65 = vmul.f32 %v63, %v63
    %v66 = vmul.f32 %v64, %v64
    %v67 = vsel %vm47, %v65, 0.0
    %68 = vadd.xlane.f32.xlu0 %v67
    %v69 = vpop.xlane.xlu0 %68
    %v70 = vsel %vm47, %v66, 0.0
    %71 = vadd.xlane.f32.xlu0 %v70
    %v72 = vpop.xlane.xlu0 %71
    %v73 = vmul.f32 %v69, %v60
    %v74 = vmul.f32 %v72, %v60
    %v75 = vadd.f32 %v73, 1e-05
    %v76 = vadd.f32 %v74, 1e-05
    %v77 = vrsqrt.pop %v75
    %v78 = vmul.f32 %v77, %v75
    %v79 = vmul.f32 %v78, %v77
    %v80 = vmul.f32 0.5, %v79
    %v81 = vsub.f32 1.5, %v80
    %v82 = vmul.f32 %v77, %v81
    %vm83 = vweird.f32 %v75
    %vm84 = vweird.f32 %v77
    %vm85 = vmor %vm83, %vm84
    %v86 = vsel %vm85, %v77, %v82
    %v87 = vrsqrt.pop %v76
    %v88 = vmul.f32 %v87, %v76
    %v89 = vmul.f32 %v88, %v87
    %v90 = vmul.f32 0.5, %v89
    %v91 = vsub.f32 1.5, %v90
    %v92 = vmul.f32 %v87, %v91
    %vm93 = vweird.f32 %v76
    %vm94 = vweird.f32 %v87
    %vm95 = vmor %vm93, %vm94
    %v96 = vsel %vm95, %v87, %v92
    %v97 = vmul.f32 %v63, %v86
    %v98 = vmul.f32 %v64, %v96
    %v99 = vld [vmem:[#allocation5] sm:$0x1]
    %v101 = vperm.slane %v99, 0
    %v103 = vmul.f32 %v97, %v101
    %v104 = vmul.f32 %v98, %v101
    %v105 = vld [vmem:[%s2] sm:$0x1]
    %v107 = vperm.slane %v105, 0
    %v109 = vadd.f32 %v103, %v107
    %v110 = vadd.f32 %v104, %v107
    %111 = vst.msk [vmem:[#allocation7] sm:$0xff] %vm47, %v109
    %112 = vst.msk [vmem:[#allocation7 + $0x8] sm:$0xff] %vm47, %v110
    // Predicated region
    $region22: #{tpu_custom_call.1} parent=1 // pred_check
      _
    $region23: #{tpu_custom_call.1} parent=1 // pred_check_branch
      %114 = sbr.rel (0) target = $region25
    $region24: #{tpu_custom_call.1} parent=1 // pred_region
      %116 = vsyncadd [#allocation4], 0
      %s117 = sshll.u32 [#allocation7], 4
      %s118 = int_to_ptr.vmem [resolvable:$true] %s117
      %s119 = sshll.u32 %s3, 4
      %s120 = int_to_ptr.hbm [resolvable:$true] %s119
      %125 = dma.vmem_to_hbm [thread:$0]  %s118, 256, %s120, [#allocation4], 128, 128, 8
    $region25: #{tpu_custom_call.1} parent=1 // pred_fallthru
      _
    // Predicated region
    $region26: #{tpu_custom_call.1} parent=1 // pred_check
      _
    $region27: #{tpu_custom_call.1} parent=1 // pred_check_branch
      %127 = sbr.rel (0) target = $region29
    $region28: #{tpu_custom_call.1} parent=1 // pred_region
      %129 = dma.done [#allocation4], 256
    $region29: #{tpu_custom_call.1} parent=1 // pred_fallthru
      _
    %130 = vsyncpa [#allocation3], 1
    %131 = vsyncpa [#allocation6], 1
    %132 = vsyncpa [#allocation4], 1

</llo_original>
